<compile_context>
chip_gen: v5e
topology: v5e:2x2
jax: 0.10.0
libtpu: 0.0.40
codegen_flags: <defaults>
</compile_context>

<pallas_src>
import jax
import jax.numpy as jnp
from jax.experimental import pallas as pl
from jax.experimental.pallas import tpu as pltpu


register_fx = []  # mirrors the reference module's global registry


# ----------------------------------------------------------------------------
# In-kernel helpers (trace-time static shapes / flags).
# ----------------------------------------------------------------------------
def _replicate_pad_hw(x, p):
    """Replicate-pad the last two dims of a (Cblk, H, W) value by p."""
    if p == 0:
        return x
    top = x[:, 0:1, :]
    bot = x[:, -1:, :]
    x = jnp.concatenate([top] * p + [x] + [bot] * p, axis=1)
    left = x[:, :, 0:1]
    right = x[:, :, -1:]
    x = jnp.concatenate([left] * p + [x] + [right] * p, axis=2)
    return x


def _apply_exponent(acc, exponent):
    # Mirrors the reference's in-place quirk:
    #   out = out.abs_() ** exponent * out.sign()
    # (abs_ mutates first, so the sign is taken of the abs'ed tensor -> {0,1}).
    a = jnp.abs(acc)
    s = jnp.where(a > 0, jnp.float32(1.0), jnp.float32(0.0))  # == sign(a), a >= 0
    e = float(exponent)
    if e.is_integer() and 1.0 <= e <= 16.0:
        n = int(e)
        powd = a
        for _ in range(n - 1):          # repeated multiplies: keeps EUP idle
            powd = powd * a
    else:
        powd = a ** jnp.float32(e)
    return powd * s


# ----------------------------------------------------------------------------
# Pallas kernel: fused pre-transforms + replicate pad + kxk cross-correlation
# + clamp/exponent + repeat loop + inverse post-transforms for one channel
# block (Cblk, H, W).
# ----------------------------------------------------------------------------
def _make_conv_kernel(Cblk, H, W, k, p, clamp, exponent, invert, symmetric,
                      repeat):
    del Cblk  # shape comes from the refs

    def kernel(x_ref, w_ref, o_ref):
        # x_ref: (Cblk, H, W) VMEM block; w_ref: (k*k,) SMEM; o_ref: (Cblk, H, W)
        w = [w_ref[i] for i in range(k * k)]       # hoist all scalar reads
        x = x_ref[...].astype(jnp.float32)

        # Fused pre-transforms (static trace-time flags).
        if invert:
            x = 1.0 - x
        if symmetric:
            x = x * 2.0 - 1.0

        # Fused repeat loop: working set stays resident, no HBM round trips.
        for _ in range(repeat):
            xpad = _replicate_pad_hw(x, p)
            acc = None
            for di in range(k):
                for dj in range(k):
                    term = w[di * k + dj] * xpad[:, di:di + H, dj:dj + W]
                    acc = term if acc is None else acc + term
            if clamp is not None:
                acc = jnp.clip(acc, clamp[0], clamp[1])
            if exponent != 1:
                acc = _apply_exponent(acc, exponent)
            x = acc

        # Fused inverse post-transforms (note: `elif`, mirroring the reference).
        if symmetric:
            x = (x + 1.0) * 0.5
        elif invert:
            x = 1.0 - x

        o_ref[...] = x.astype(o_ref.dtype)

    return kernel


def _choose_cblk(C, H, W, k):
    """Channels per grid step: big blocks, VMEM-safe on v7x, >=2 blocks."""
    Hp, Wp = H + k - 1, W + k - 1
    # Rough per-channel f32 footprint: double-buffered in + out blocks, the
    # padded temp, and a couple of live accumulator values.
    per_ch = 4 * (4 * H * W + Hp * Wp + 2 * H * W)
    budget = 8 * 1024 * 1024     # headroom under the 32 MiB scoped-VMEM default
    cblk = max(1, budget // max(per_ch, 1))
    if C >= 2:
        # Keep >= 2 channel blocks so both v7x TensorCores get work.
        cblk = min(cblk, max(1, C // 2))
    return int(min(cblk, C))


def _conv2d_pallas(x, w_flat, k, p, clamp, exponent, invert, symmetric, repeat):
    C, H, W = x.shape
    cblk = _choose_cblk(C, H, W, k)
    grid = (pl.cdiv(C, cblk),)
    kernel = _make_conv_kernel(cblk, H, W, k, p, clamp, exponent, invert,
                               symmetric, repeat)
    return pl.pallas_call(
        kernel,
        out_shape=jax.ShapeDtypeStruct((C, H, W), x.dtype),
        grid=grid,
        in_specs=[
            pl.BlockSpec((cblk, H, W), lambda c: (c, 0, 0)),
            pl.BlockSpec(memory_space=pltpu.MemorySpace.SMEM),
        ],
        out_specs=pl.BlockSpec((cblk, H, W), lambda c: (c, 0, 0)),
        compiler_params=pltpu.CompilerParams(
            dimension_semantics=("parallel",),
            vmem_limit_bytes=32 * 1024 * 1024,
        ),
    )(x, w_flat)


# ----------------------------------------------------------------------------
# Module-equivalent wrapper (mirrors the PyTorch reference exactly, including
# the quirky W/H name swap in prepare_tensor).
# ----------------------------------------------------------------------------
def prepare_tensor(x):
    x = jnp.squeeze(x)
    W, H = x.shape[-2:]
    x = x.reshape((1, -1, H, W))
    assert x.shape[1] < W, "likely using numpy format (H, W, C)"
    return x


class Conv2d:
    def __init__(self, kernel_weight):
        w = jnp.asarray(kernel_weight, dtype=jnp.float32)
        k = int(w.shape[0])
        self.kernel_size = k
        self.padding = (k - 1) // 2
        self.weight = w.reshape((k, k))
        self.weight_flat = w.reshape((k * k,))
        register_fx.append(self)

    def __call__(self, x, clamp=None, exponent=1, invert=False,
                 symmetric=False, repeat=1):
        shape = x.shape
        out = prepare_tensor(x)          # (1, C, H, W) with batch folded into C
        out = out[0]                     # (C, H, W) channel-major for the kernel
        out = _conv2d_pallas(out, self.weight_flat, self.kernel_size,
                             self.padding, clamp, exponent, invert,
                             symmetric, repeat)
        return out.reshape(shape)


# ----------------------------------------------------------------------------
# Pure-JAX reference (no Pallas) for correctness checks (all options).
# ----------------------------------------------------------------------------
def _ref_forward(x, weight, padding, clamp=None, exponent=1, invert=False,
                 symmetric=False, repeat=1):
    shape = x.shape
    out = prepare_tensor(x)[0].astype(jnp.float32)   # (C, H, W)
    H, W = out.shape[1], out.shape[2]
    k = weight.shape[0]
    if invert:
        out = 1.0 - out
    if symmetric:
        out = out * 2.0 - 1.0
    for _ in range(repeat):
        xpad = jnp.pad(out, ((0, 0), (padding, padding), (padding, padding)),
                       mode="edge")
        acc = jnp.zeros_like(out)
        for di in range(k):
            for dj in range(k):
                acc = acc + weight[di, dj] * xpad[:, di:di + H, dj:dj + W]
        if clamp is not None:
            acc = jnp.clip(acc, clamp[0], clamp[1])
        if exponent != 1:
            a = jnp.abs(acc)
            acc = a ** exponent * jnp.sign(a)
        out = acc
    if symmetric:
        out = (out + 1.0) / 2.0
    elif invert:
        out = 1.0 - out
    return out.reshape(shape)


if __name__ == "__main__":
    # Deterministic 3x3 blur-like kernel (kernel_size=3, padding=1).
    kernel_weight = [[1.0, 2.0, 1.0],
                     [2.0, 4.0, 2.0],
                     [1.0, 2.0, 1.0]]
    kernel_weight = [[v / 16.0 for v in row] for row in kernel_weight]

    conv = Conv2d(kernel_weight)

    key = jax.random.PRNGKey(0)
    # NCHW input; prepare_tensor collapses it to (1, 8, 16, 16).
    x = jax.random.uniform(key, (2, 4, 16, 16), dtype=jnp.float32)

    # 1) default path: clamp=None, exponent=1, repeat=1
    y = jax.block_until_ready(conv(x))
    y_ref = _ref_forward(x, conv.weight, conv.padding)
    assert y.shape == x.shape and y.dtype == x.dtype
    assert jnp.allclose(y, y_ref, atol=1e-5, rtol=1e-5)

    # 2) fused clamp + integer exponent + invert + repeat
    y2 = jax.block_until_ready(
        conv(x, clamp=(0.2, 0.8), exponent=2, invert=True, repeat=2))
    y2_ref = _ref_forward(x, conv.weight, conv.padding,
                          clamp=(0.2, 0.8), exponent=2, invert=True, repeat=2)
    assert jnp.allclose(y2, y2_ref, atol=1e-5, rtol=1e-5)

    # 3) symmetric pre/post transform + fused repeat
    y3 = jax.block_until_ready(conv(x, symmetric=True, repeat=2))
    y3_ref = _ref_forward(x, conv.weight, conv.padding, symmetric=True,
                          repeat=2)
    assert jnp.allclose(y3, y3_ref, atol=1e-5, rtol=1e-5)

    print("KERNEL_OK")
</pallas_src>

<mosaic_0001>
module attributes {stable_mosaic.version = 11 : i64} {
  func.func @kernel(%arg0: i32, %arg1: memref<4x16x16xf32, #tpu.memory_space<vmem>>, %arg2: memref<9xf32, #tpu.memory_space<smem>>, %arg3: memref<4x16x16xf32, #tpu.memory_space<vmem>>) attributes {dimension_semantics = [#tpu.dimension_semantics<parallel>], iteration_bounds = array<i64: 2>, scalar_prefetch = 0 : i64, scratch_operands = 0 : i64, tpu.core_type = #tpu.core_type<tc>, window_params = [{transform_indices = @transform_0, window_bounds = array<i64: 4, 16, 16>}, {transform_indices = @transform_1, window_bounds = array<i64: 9>}, {transform_indices = @transform_2, window_bounds = array<i64: 4, 16, 16>}]} {
    %c0 = arith.constant 0 : index
    %0 = memref.load %arg2[%c0] : memref<9xf32, #tpu.memory_space<smem>>
    %c1 = arith.constant 1 : index
    %1 = memref.load %arg2[%c1] : memref<9xf32, #tpu.memory_space<smem>>
    %c2 = arith.constant 2 : index
    %2 = memref.load %arg2[%c2] : memref<9xf32, #tpu.memory_space<smem>>
    %c3 = arith.constant 3 : index
    %3 = memref.load %arg2[%c3] : memref<9xf32, #tpu.memory_space<smem>>
    %c4 = arith.constant 4 : index
    %4 = memref.load %arg2[%c4] : memref<9xf32, #tpu.memory_space<smem>>
    %c5 = arith.constant 5 : index
    %5 = memref.load %arg2[%c5] : memref<9xf32, #tpu.memory_space<smem>>
    %c6 = arith.constant 6 : index
    %6 = memref.load %arg2[%c6] : memref<9xf32, #tpu.memory_space<smem>>
    %c7 = arith.constant 7 : index
    %7 = memref.load %arg2[%c7] : memref<9xf32, #tpu.memory_space<smem>>
    %c8 = arith.constant 8 : index
    %8 = memref.load %arg2[%c8] : memref<9xf32, #tpu.memory_space<smem>>
    %c0_0 = arith.constant 0 : index
    %c0_1 = arith.constant 0 : index
    %c0_2 = arith.constant 0 : index
    %9 = vector.load %arg1[%c0_0, %c0_1, %c0_2] : memref<4x16x16xf32, #tpu.memory_space<vmem>>, vector<4x16x16xf32>
    %10 = vector.extract_strided_slice %9 {offsets = [0, 0, 0], sizes = [4, 1, 16], strides = [1, 1, 1]} : vector<4x16x16xf32> to vector<4x1x16xf32>
    %11 = vector.extract_strided_slice %9 {offsets = [0, 15, 0], sizes = [4, 1, 16], strides = [1, 1, 1]} : vector<4x16x16xf32> to vector<4x1x16xf32>
    %12 = tpu.concatenate %10, %9, %11 in 1 : vector<4x1x16xf32>, vector<4x16x16xf32>, vector<4x1x16xf32> -> vector<4x18x16xf32>
    %13 = vector.extract_strided_slice %12 {offsets = [0, 0, 0], sizes = [4, 18, 1], strides = [1, 1, 1]} : vector<4x18x16xf32> to vector<4x18x1xf32>
    %14 = vector.extract_strided_slice %12 {offsets = [0, 0, 15], sizes = [4, 18, 1], strides = [1, 1, 1]} : vector<4x18x16xf32> to vector<4x18x1xf32>
    %15 = tpu.concatenate %13, %12, %14 in 2 : vector<4x18x1xf32>, vector<4x18x16xf32>, vector<4x18x1xf32> -> vector<4x18x18xf32>
    %16 = vector.extract_strided_slice %15 {offsets = [0, 0, 0], sizes = [4, 16, 16], strides = [1, 1, 1]} : vector<4x18x18xf32> to vector<4x16x16xf32>
    %17 = vector.broadcast %0 : f32 to vector<4x16x16xf32>
    %18 = arith.mulf %17, %16 : vector<4x16x16xf32>
    %19 = vector.extract_strided_slice %15 {offsets = [0, 0, 1], sizes = [4, 16, 16], strides = [1, 1, 1]} : vector<4x18x18xf32> to vector<4x16x16xf32>
    %20 = vector.broadcast %1 : f32 to vector<4x16x16xf32>
    %21 = arith.mulf %20, %19 : vector<4x16x16xf32>
    %22 = arith.addf %18, %21 : vector<4x16x16xf32>
    %23 = vector.extract_strided_slice %15 {offsets = [0, 0, 2], sizes = [4, 16, 16], strides = [1, 1, 1]} : vector<4x18x18xf32> to vector<4x16x16xf32>
    %24 = vector.broadcast %2 : f32 to vector<4x16x16xf32>
    %25 = arith.mulf %24, %23 : vector<4x16x16xf32>
    %26 = arith.addf %22, %25 : vector<4x16x16xf32>
    %27 = vector.extract_strided_slice %15 {offsets = [0, 1, 0], sizes = [4, 16, 16], strides = [1, 1, 1]} : vector<4x18x18xf32> to vector<4x16x16xf32>
    %28 = vector.broadcast %3 : f32 to vector<4x16x16xf32>
    %29 = arith.mulf %28, %27 : vector<4x16x16xf32>
    %30 = arith.addf %26, %29 : vector<4x16x16xf32>
    %31 = vector.extract_strided_slice %15 {offsets = [0, 1, 1], sizes = [4, 16, 16], strides = [1, 1, 1]} : vector<4x18x18xf32> to vector<4x16x16xf32>
    %32 = vector.broadcast %4 : f32 to vector<4x16x16xf32>
    %33 = arith.mulf %32, %31 : vector<4x16x16xf32>
    %34 = arith.addf %30, %33 : vector<4x16x16xf32>
    %35 = vector.extract_strided_slice %15 {offsets = [0, 1, 2], sizes = [4, 16, 16], strides = [1, 1, 1]} : vector<4x18x18xf32> to vector<4x16x16xf32>
    %36 = vector.broadcast %5 : f32 to vector<4x16x16xf32>
    %37 = arith.mulf %36, %35 : vector<4x16x16xf32>
    %38 = arith.addf %34, %37 : vector<4x16x16xf32>
    %39 = vector.extract_strided_slice %15 {offsets = [0, 2, 0], sizes = [4, 16, 16], strides = [1, 1, 1]} : vector<4x18x18xf32> to vector<4x16x16xf32>
    %40 = vector.broadcast %6 : f32 to vector<4x16x16xf32>
    %41 = arith.mulf %40, %39 : vector<4x16x16xf32>
    %42 = arith.addf %38, %41 : vector<4x16x16xf32>
    %43 = vector.extract_strided_slice %15 {offsets = [0, 2, 1], sizes = [4, 16, 16], strides = [1, 1, 1]} : vector<4x18x18xf32> to vector<4x16x16xf32>
    %44 = vector.broadcast %7 : f32 to vector<4x16x16xf32>
    %45 = arith.mulf %44, %43 : vector<4x16x16xf32>
    %46 = arith.addf %42, %45 : vector<4x16x16xf32>
    %47 = vector.extract_strided_slice %15 {offsets = [0, 2, 2], sizes = [4, 16, 16], strides = [1, 1, 1]} : vector<4x18x18xf32> to vector<4x16x16xf32>
    %48 = vector.broadcast %8 : f32 to vector<4x16x16xf32>
    %49 = arith.mulf %48, %47 : vector<4x16x16xf32>
    %50 = arith.addf %46, %49 : vector<4x16x16xf32>
    %c0_3 = arith.constant 0 : index
    %c0_4 = arith.constant 0 : index
    %c0_5 = arith.constant 0 : index
    %51 = vector.load %arg3[%c0_3, %c0_4, %c0_5] : memref<4x16x16xf32, #tpu.memory_space<vmem>>, vector<4x16x16xf32>
    tpu.vector_store %arg3[%c0_3, %c0_4, %c0_5], %50 {strides = array<i32>} : memref<4x16x16xf32, #tpu.memory_space<vmem>>, vector<4x16x16xf32>,
    return
  }
  func.func @transform_0(%arg0: i32) -> (i32, i32, i32) {
    %c0_i32 = arith.constant 0 : i32
    %c0_i32_0 = arith.constant 0 : i32
    %c0_i32_1 = arith.constant 0 : i32
    return %arg0, %c0_i32, %c0_i32_0 : i32, i32, i32
  }
  func.func @transform_1(%arg0: i32) -> i32 {
    %c0_i32 = arith.constant 0 : i32
    %c0_i32_0 = arith.constant 0 : i32
    return %c0_i32 : i32
  }
  func.func @transform_2(%arg0: i32) -> (i32, i32, i32) {
    %c0_i32 = arith.constant 0 : i32
    %c0_i32_0 = arith.constant 0 : i32
    %c0_i32_1 = arith.constant 0 : i32
    return %arg0, %c0_i32, %c0_i32_0 : i32, i32, i32
  }
}

</mosaic_0001>

<llo_original>
// kernel: tpu_custom_call.1
$region0: #{tpu_custom_call.1}
  #allocation0 [shape = 'u32[]', space=smem, size = 0x4, offset = 0x4, fixed_abs, tag = 'smem constant byte address 0x4 - core index']
  #allocation1 [shape = 'u32[72,128]{1,0:T(1,128)}', space=vmem, size = 0x9000, scoped, tag = 'internal scratch']
  %s0 = inlined_call_operand.hbm [shape: f32[8,16,16], index: 0, kind: input, shape index: {}]
  %s1 = inlined_call_operand.hbm [shape: f32[9], index: 1, kind: input, shape index: {}]
  %s2 = inlined_call_operand.hbm [shape: f32[8,16,16], index: 2, kind: output, shape index: {}]
  %s3 = sld [smem:[#allocation0]]
  $region49: #{tpu_custom_call.1} parent=0
    _
  %s5 = ssub.s32 1, %s3
  %s6 = scalar_select 0, %s5, %s3
  $region1: #{tpu_custom_call.1} parent=0
    #allocation2 [shape = 'u8[65536]{0}', space=vmem, size = 0x10000, scoped, tag = 'input window, operand 0']
    #allocation3 [shape = 's32[2]{0}', space=sflag, size = 0x8, scoped, tag = 'scoped memory for tpu_custom_call.1']
    #allocation4 [shape = 's32[2]{0}', space=sflag, size = 0x8, scoped, tag = 'scoped memory for tpu_custom_call.1']
    #allocation5 [shape = 's32[2]{0}', space=sflag, size = 0x8, scoped, tag = 'scoped memory for tpu_custom_call.1']
    #allocation6 [shape = 'u8[512]{0}', space=smem, size = 0x200, scoped, tag = 'input window, operand 1, single buffered']
    #allocation7 [shape = 'u8[65536]{0}', space=vmem, size = 0x10000, scoped, tag = 'output window, operand 0']
    %7 = vsyncpa [#allocation3], 0
    %s8 = scalar_lea.sflag [#allocation3], 1
    %9 = vsyncpa %s8, 0
    %10 = vsyncpa [#allocation5], 0
    %11 = vsyncpa [#allocation4], 0
    %s12 = scalar_lea.sflag [#allocation4], 1
    %13 = vsyncpa %s12, 0
    loop: start=0, step=1, limit=4
    $region2: #{tpu_custom_call.1} parent=1 // loop_pre_header
      _
    $region3: #{tpu_custom_call.1} parent=1 // loop_header
      %s15 = sphi 0, %s19
      %p16 = scmp.ge.s32.totalorder %s15, 4
      %s25 = sphi 0, %s27
      %s28 = sphi 0, %s25
      %s29 = sphi 0, %s28
      %s45 = sphi 0, %s29
      %s49 = sphi 0, %s49
      %s51 = sphi 0, %s49
      %s52 = sphi 0, %s51
      %s66 = sphi 0, %s52
      %s72 = sphi 0, %s74
      %s75 = sphi 0, %s72
      %s76 = sphi 0, %s75
      %s92 = sphi 0, %s76
    $region4: #{tpu_custom_call.1} parent=1 // loop_header_branch
      %18 = sbr.rel (%p16) target = $region8
    $region5: #{tpu_custom_call.1} parent=1 // loop_body
      %s20 = ssub.s32 %s15, 1
      %s21 = ssub.s32 %s15, 2
      %s22 = sadd.s32 %s15, 1
      %s23 = ssub.s32 %s15, %s22
      %p24 = scmp.eq.s32.totalorder %s23, 0
      %s26 = sadd.s32 %s25, 1
      %s27 = scalar_select %p24, %s25, %s26
      %p30 = pneg %p24
      %p31 = scmp.eq.s32.totalorder %s15, 1
      %p32 = por %p30, %p31
      %p33 = scmp.ne.s32.totalorder %s25, %s28
      %p34 = scmp.eq.s32.totalorder %s15, 0
      %p35 = por %p33, %p34
      %p36 = scmp.ne.s32.totalorder %s25, %s28
      %p37 = scmp.eq.s32.totalorder %s20, 1
      %p38 = por %p36, %p37
      %p39 = scmp.ne.s32.totalorder %s28, %s29
      %p40 = scmp.eq.s32.totalorder %s20, 0
      %p41 = por %p39, %p40
      %p42 = scmp.ne.s32.totalorder %s28, %s29
      %p43 = scmp.eq.s32.totalorder %s21, 1
      %p44 = por %p42, %p43
      %p46 = scmp.ne.s32.totalorder %s29, %s45
      %p47 = scmp.eq.s32.totalorder %s21, 0
      %p48 = por %p46, %p47
      %s50 = sadd.s32 %s49, 1
      %p53 = scmp.eq.s32.totalorder %s15, 1
      %p54 = scmp.ne.s32.totalorder %s49, %s51
      %p55 = scmp.eq.s32.totalorder %s15, 0
      %p56 = por %p54, %p55
      %p57 = scmp.ne.s32.totalorder %s49, %s51
      %p58 = scmp.eq.s32.totalorder %s20, 1
      %p59 = por %p57, %p58
      %p60 = scmp.ne.s32.totalorder %s51, %s52
      %p61 = scmp.eq.s32.totalorder %s20, 0
      %p62 = por %p60, %p61
      %p63 = scmp.ne.s32.totalorder %s51, %s52
      %p64 = scmp.eq.s32.totalorder %s21, 1
      %p65 = por %p63, %p64
      %p67 = scmp.ne.s32.totalorder %s52, %s66
      %p68 = scmp.eq.s32.totalorder %s21, 0
      %p69 = por %p67, %p68
      %s70 = ssub.s32 %s15, %s22
      %p71 = scmp.eq.s32.totalorder %s70, 0
      %s73 = sadd.s32 %s72, 1
      %s74 = scalar_select %p71, %s72, %s73
      %p77 = pneg %p71
      %p78 = scmp.eq.s32.totalorder %s15, 1
      %p79 = por %p77, %p78
      %p80 = scmp.ne.s32.totalorder %s72, %s75
      %p81 = scmp.eq.s32.totalorder %s15, 0
      %p82 = por %p80, %p81
      %p83 = scmp.ne.s32.totalorder %s72, %s75
      %p84 = scmp.eq.s32.totalorder %s20, 1
      %p85 = por %p83, %p84
      %p86 = scmp.ne.s32.totalorder %s75, %s76
      %p87 = scmp.eq.s32.totalorder %s20, 0
      %p88 = por %p86, %p87
      %p89 = scmp.ne.s32.totalorder %s75, %s76
      %p90 = scmp.eq.s32.totalorder %s21, 1
      %p91 = por %p89, %p90
      %p93 = scmp.ne.s32.totalorder %s76, %s92
      %p94 = scmp.eq.s32.totalorder %s21, 0
      %p95 = por %p93, %p94
      %p96 = scmp.le.s32.totalorder 1, %s15
      %p97 = scmp.lt.s32.totalorder %s15, 3
      %p98 = pnand %p96, %p97
      %p99 = pneg %p98
      // Predicated region
      $region9: #{tpu_custom_call.1} parent=5 // pred_check
        _
      $region10: #{tpu_custom_call.1} parent=5 // pred_check_branch
        %101 = sbr.rel (%p98) target = $region12
      $region11: #{tpu_custom_call.1} parent=5 // pred_region
        %s102 = ssub.s32 %s15, 1
        // Predicated region
        $region13: #{tpu_custom_call.1} parent=11 // pred_check
          %p103 = pneg %p62
        $region14: #{tpu_custom_call.1} parent=11 // pred_check_branch
          %105 = sbr.rel (%p103) target = $region16
        $region15: #{tpu_custom_call.1} parent=11 // pred_region
          %107 = vsyncadd [#allocation5], 0
          %s109 = sshll.u32 %s1, 4
          %s110 = int_to_ptr.hbm [resolvable:$true] %s109
          %112 = dma.hbm_to_smem %s110, 16, [#allocation6], [#allocation5]
        $region16: #{tpu_custom_call.1} parent=11 // pred_fallthru
          _
      $region12: #{tpu_custom_call.1} parent=5 // pred_fallthru
        _
      %p113 = scmp.lt.s32.totalorder %s15, 2
      // Predicated region
      $region17: #{tpu_custom_call.1} parent=5 // pred_check
        %p114 = pneg %p113
      $region18: #{tpu_custom_call.1} parent=5 // pred_check_branch
        %116 = sbr.rel (%p114) target = $region20
      $region19: #{tpu_custom_call.1} parent=5 // pred_region
        // Predicated region
        $region21: #{tpu_custom_call.1} parent=19 // pred_check
          %p117 = pneg %p35
        $region22: #{tpu_custom_call.1} parent=19 // pred_check_branch
          %119 = sbr.rel (%p117) target = $region24
        $region23: #{tpu_custom_call.1} parent=19 // pred_region
          %s120 = sand.u32 %s25, 1
          %s121 = scalar_lea.sflag [#allocation3], %s120
          %s122 = sand.u32 %s25, 1
          %s123 = smul.addr %s122, 64
          %s124 = scalar_lea.vmem [#allocation2], %s123
          %s125 = smul.u32 4, %s15
          %127 = vsyncadd %s121, 0
          %s128 = smul.addr %s125, 2
          %s129 = smul.addr %s128, 8
          %s130 = scalar_lea.hbm %s0, %s129
          %s131 = sshll.u32 %s130, 4
          %s132 = int_to_ptr.hbm [resolvable:$true] %s131
          %s133 = sshll.u32 %s124, 4
          %s134 = int_to_ptr.vmem [resolvable:$true] %s133
          %139 = dma.hbm_to_vmem [thread:$0]  %s132, 1024, %s134, %s121, 128, 128, 8
        $region24: #{tpu_custom_call.1} parent=19 // pred_fallthru
          _
      $region20: #{tpu_custom_call.1} parent=5 // pred_fallthru
        _
      %p140 = scmp.le.s32.totalorder 1, %s15
      %p141 = scmp.lt.s32.totalorder %s15, 3
      %p142 = pnand %p140, %p141
      %p143 = pneg %p142
      // Predicated region
      $region25: #{tpu_custom_call.1} parent=5 // pred_check
        _
      $region26: #{tpu_custom_call.1} parent=5 // pred_check_branch
        %145 = sbr.rel (%p142) target = $region28
      $region27: #{tpu_custom_call.1} parent=5 // pred_region
        %s146 = ssub.s32 %s15, 1
        %s147 = sand.u32 %s28, 1
        %s148 = scalar_lea.sflag [#allocation3], %s147
        %s149 = sand.u32 %s28, 1
        %s150 = smul.addr %s149, 64
        %s151 = scalar_lea.vmem [#allocation2], %s150
        // Predicated region
        $region29: #{tpu_custom_call.1} parent=27 // pred_check
          %p152 = pneg %p41
        $region30: #{tpu_custom_call.1} parent=27 // pred_check_branch
          %154 = sbr.rel (%p152) target = $region32
        $region31: #{tpu_custom_call.1} parent=27 // pred_region
          %156 = dma.done %s148, 1024
        $region32: #{tpu_custom_call.1} parent=27 // pred_fallthru
          _
        // Predicated region
        $region33: #{tpu_custom_call.1} parent=27 // pred_check
          %p157 = pneg %p62
        $region34: #{tpu_custom_call.1} parent=27 // pred_check_branch
          %159 = sbr.rel (%p157) target = $region36
        $region35: #{tpu_custom_call.1} parent=27 // pred_region
          %161 = dma.done [#allocation5], 16
        $region36: #{tpu_custom_call.1} parent=27 // pred_fallthru
          _
        %162 = sfence
        %s163 = sand.u32 %s28, 1
        %s164 = scalar_lea.sflag [#allocation3], %s163
        %s165 = sand.u32 %s28, 1
        %s166 = smul.addr %s165, 64
        %s167 = scalar_lea.vmem [#allocation2], %s166
        %p168 = pneg %p41
        %p169 = pneg %p38
        %p170 = pneg %p62
        %p171 = pneg %p59
        %p172 = pneg %p88
        %p173 = pneg %p85
        %s174 = sand.u32 %s75, 1
        %s175 = scalar_lea.sflag [#allocation4], %s174
        %s176 = sand.u32 %s75, 1
        %s177 = smul.addr %s176, 64
        %s178 = scalar_lea.vmem [#allocation7], %s177
        %s179 = smul.u32 4, %s20
        %s180 = smul.u32 4, %s20
        %s181 = sld [smem:[#allocation6]]
        %s182 = sld [smem:[#allocation6 + $0x1]]
        %s183 = sld [smem:[#allocation6 + $0x2]]
        %s184 = sld [smem:[#allocation6 + $0x3]]
        %s185 = sld [smem:[#allocation6 + $0x4]]
        %s186 = sld [smem:[#allocation6 + $0x5]]
        %s187 = sld [smem:[#allocation6 + $0x6]]
        %s188 = sld [smem:[#allocation6 + $0x7]]
        %s189 = sld [smem:[#allocation6 + $0x8]]
        %v190 = vld [vmem:[%s151] sm:$0xff]
        %v191 = vld [vmem:[%s151 + $0x8] sm:$0xff]
        %v192 = vld [vmem:[%s151 + $0x10] sm:$0xff]
        %v193 = vld [vmem:[%s151 + $0x18] sm:$0xff]
        %v194 = vld [vmem:[%s151 + $0x20] sm:$0xff]
        %v195 = vld [vmem:[%s151 + $0x28] sm:$0xff]
        %v196 = vld [vmem:[%s151 + $0x30] sm:$0xff]
        %v197 = vld [vmem:[%s151 + $0x38] sm:$0xff]
        %vm206 = vcmask 1040384
        %v207 = vrot.slane %v190, 7
        %v208 = vrot.slane %v191, 7
        %v209 = vsel %vm206, %v207, %v208
        %v210 = vrot.slane %v192, 7
        %v211 = vrot.slane %v193, 7
        %v212 = vsel %vm206, %v210, %v211
        %v213 = vrot.slane %v194, 7
        %v214 = vrot.slane %v195, 7
        %v215 = vsel %vm206, %v213, %v214
        %v216 = vrot.slane %v196, 7
        %v217 = vrot.slane %v197, 7
        %v218 = vsel %vm206, %v216, %v217
        %v231 = vrot.slane %v191, 6
        %v232 = vrot.slane %v193, 6
        %v233 = vrot.slane %v195, 6
        %v234 = vrot.slane %v197, 6
        %v239 = vsel %vm206, %v190, %v207
        %v240 = vsel %vm206, %v192, %v210
        %v241 = vsel %vm206, %v194, %v213
        %v242 = vsel %vm206, %v196, %v216
        %v243 = vsel %vm206, %v208, %v231
        %v244 = vsel %vm206, %v211, %v232
        %v245 = vsel %vm206, %v214, %v233
        %v246 = vsel %vm206, %v217, %v234
        %255 = vrot.lane.b32.xlu0 %v239, 1
        %v256 = vpop.permute.xlu0 %255
        %257 = vrot.lane.b32.xlu0 %v209, 1
        %v258 = vpop.permute.xlu0 %257
        %259 = vrot.lane.b32.xlu0 %v243, 1
        %v260 = vpop.permute.xlu0 %259
        %261 = vrot.lane.b32.xlu0 %v240, 1
        %v262 = vpop.permute.xlu0 %261
        %263 = vrot.lane.b32.xlu0 %v212, 1
        %v264 = vpop.permute.xlu0 %263
        %265 = vrot.lane.b32.xlu0 %v244, 1
        %v266 = vpop.permute.xlu0 %265
        %267 = vrot.lane.b32.xlu0 %v241, 1
        %v268 = vpop.permute.xlu0 %267
        %269 = vrot.lane.b32.xlu0 %v215, 1
        %v270 = vpop.permute.xlu0 %269
        %271 = vrot.lane.b32.xlu0 %v245, 1
        %v272 = vpop.permute.xlu0 %271
        %273 = vrot.lane.b32.xlu0 %v242, 1
        %v274 = vpop.permute.xlu0 %273
        %275 = vrot.lane.b32.xlu0 %v218, 1
        %v276 = vpop.permute.xlu0 %275
        %277 = vrot.lane.b32.xlu0 %v246, 1
        %v278 = vpop.permute.xlu0 %277
        %291 = vrot.lane.b32.xlu0 %v239, 2
        %v292 = vpop.permute.xlu0 %291
        %293 = vrot.lane.b32.xlu0 %v209, 2
        %v294 = vpop.permute.xlu0 %293
        %295 = vrot.lane.b32.xlu0 %v243, 2
        %v296 = vpop.permute.xlu0 %295
        %297 = vrot.lane.b32.xlu0 %v240, 2
        %v298 = vpop.permute.xlu0 %297
        %299 = vrot.lane.b32.xlu0 %v212, 2
        %v300 = vpop.permute.xlu0 %299
        %301 = vrot.lane.b32.xlu0 %v244, 2
        %v302 = vpop.permute.xlu0 %301
        %303 = vrot.lane.b32.xlu0 %v241, 2
        %v304 = vpop.permute.xlu0 %303
        %305 = vrot.lane.b32.xlu0 %v215, 2
        %v306 = vpop.permute.xlu0 %305
        %307 = vrot.lane.b32.xlu0 %v245, 2
        %v308 = vpop.permute.xlu0 %307
        %309 = vrot.lane.b32.xlu0 %v242, 2
        %v310 = vpop.permute.xlu0 %309
        %311 = vrot.lane.b32.xlu0 %v218, 2
        %v312 = vpop.permute.xlu0 %311
        %313 = vrot.lane.b32.xlu0 %v246, 2
        %v314 = vpop.permute.xlu0 %313
        %vm327 = vcmask 7168
        %v328 = vsel %vm327, %v239, %v256
        %v329 = vsel %vm327, %v209, %v258
        %v330 = vsel %vm327, %v243, %v260
        %v331 = vsel %vm327, %v240, %v262
        %v332 = vsel %vm327, %v212, %v264
        %v333 = vsel %vm327, %v244, %v266
        %v334 = vsel %vm327, %v241, %v268
        %v335 = vsel %vm327, %v215, %v270
        %v336 = vsel %vm327, %v245, %v272
        %v337 = vsel %vm327, %v242, %v274
        %v338 = vsel %vm327, %v218, %v276
        %v339 = vsel %vm327, %v246, %v278
        %vm340 = vcmask 138240
        %v341 = vsel %vm340, %v328, %v292
        %v342 = vsel %vm340, %v329, %v294
        %v343 = vsel %vm340, %v330, %v296
        %v344 = vsel %vm340, %v331, %v298
        %v345 = vsel %vm340, %v332, %v300
        %v346 = vsel %vm340, %v333, %v302
        %v347 = vsel %vm340, %v334, %v304
        %v348 = vsel %vm340, %v335, %v306
        %v349 = vsel %vm340, %v336, %v308
        %v350 = vsel %vm340, %v337, %v310
        %v351 = vsel %vm340, %v338, %v312
        %v352 = vsel %vm340, %v339, %v314
        %v353 = vstv %s181
        %v354 = vmul.f32 %v353, %v341
        %v355 = vmul.f32 %v353, %v342
        %v356 = vmul.f32 %v353, %v344
        %v357 = vmul.f32 %v353, %v345
        %v358 = vmul.f32 %v353, %v347
        %v359 = vmul.f32 %v353, %v348
        %v360 = vmul.f32 %v353, %v350
        %v361 = vmul.f32 %v353, %v351
        %v362 = vstv %s182
        %v363 = vmul.f32 %v362, %v341
        %v364 = vmul.f32 %v362, %v342
        %v365 = vmul.f32 %v362, %v344
        %v366 = vmul.f32 %v362, %v345
        %v367 = vmul.f32 %v362, %v347
        %v368 = vmul.f32 %v362, %v348
        %v369 = vmul.f32 %v362, %v350
        %v370 = vmul.f32 %v362, %v351
        %379 = vrot.lane.b32.xlu0 %v363, 127
        %v380 = vpop.permute.xlu0 %379
        %381 = vrot.lane.b32.xlu0 %v364, 127
        %v382 = vpop.permute.xlu0 %381
        %383 = vrot.lane.b32.xlu0 %v365, 127
        %v384 = vpop.permute.xlu0 %383
        %385 = vrot.lane.b32.xlu0 %v366, 127
        %v386 = vpop.permute.xlu0 %385
        %387 = vrot.lane.b32.xlu0 %v367, 127
        %v388 = vpop.permute.xlu0 %387
        %389 = vrot.lane.b32.xlu0 %v368, 127
        %v390 = vpop.permute.xlu0 %389
        %391 = vrot.lane.b32.xlu0 %v369, 127
        %v392 = vpop.permute.xlu0 %391
        %393 = vrot.lane.b32.xlu0 %v370, 127
        %v394 = vpop.permute.xlu0 %393
        %v403 = vadd.f32 %v354, %v380
        %v404 = vadd.f32 %v355, %v382
        %v405 = vadd.f32 %v356, %v384
        %v406 = vadd.f32 %v357, %v386
        %v407 = vadd.f32 %v358, %v388
        %v408 = vadd.f32 %v359, %v390
        %v409 = vadd.f32 %v360, %v392
        %v410 = vadd.f32 %v361, %v394
        %v411 = vstv %s183
        %v412 = vmul.f32 %v411, %v341
        %v413 = vmul.f32 %v411, %v342
        %v414 = vmul.f32 %v411, %v344
        %v415 = vmul.f32 %v411, %v345
        %v416 = vmul.f32 %v411, %v347
        %v417 = vmul.f32 %v411, %v348
        %v418 = vmul.f32 %v411, %v350
        %v419 = vmul.f32 %v411, %v351
        %428 = vrot.lane.b32.xlu0 %v412, 126
        %v429 = vpop.permute.xlu0 %428
        %430 = vrot.lane.b32.xlu0 %v413, 126
        %v431 = vpop.permute.xlu0 %430
        %432 = vrot.lane.b32.xlu0 %v414, 126
        %v433 = vpop.permute.xlu0 %432
        %434 = vrot.lane.b32.xlu0 %v415, 126
        %v435 = vpop.permute.xlu0 %434
        %436 = vrot.lane.b32.xlu0 %v416, 126
        %v437 = vpop.permute.xlu0 %436
        %438 = vrot.lane.b32.xlu0 %v417, 126
        %v439 = vpop.permute.xlu0 %438
        %440 = vrot.lane.b32.xlu0 %v418, 126
        %v441 = vpop.permute.xlu0 %440
        %442 = vrot.lane.b32.xlu0 %v419, 126
        %v443 = vpop.permute.xlu0 %442
        %v452 = vadd.f32 %v403, %v429
        %v453 = vadd.f32 %v404, %v431
        %v454 = vadd.f32 %v405, %v433
        %v455 = vadd.f32 %v406, %v435
        %v456 = vadd.f32 %v407, %v437
        %v457 = vadd.f32 %v408, %v439
        %v458 = vadd.f32 %v409, %v441
        %v459 = vadd.f32 %v410, %v443
        %v460 = vstv %s184
        %v461 = vmul.f32 %v460, %v341
        %v462 = vmul.f32 %v460, %v342
        %v463 = vmul.f32 %v460, %v343
        %v464 = vmul.f32 %v460, %v344
        %v465 = vmul.f32 %v460, %v345
        %v466 = vmul.f32 %v460, %v346
        %v467 = vmul.f32 %v460, %v347
        %v468 = vmul.f32 %v460, %v348
        %v469 = vmul.f32 %v460, %v349
        %v470 = vmul.f32 %v460, %v350
        %v471 = vmul.f32 %v460, %v351
        %v472 = vmul.f32 %v460, %v352
        %vm485 = vcmask 1046528
        %v486 = vrot.slane %v461, 1
        %v487 = vrot.slane %v462, 1
        %v488 = vsel %vm485, %v486, %v487
        %v489 = vrot.slane %v463, 1
        %v490 = vsel %vm485, %v487, %v489
        %v491 = vrot.slane %v464, 1
        %v492 = vrot.slane %v465, 1
        %v493 = vsel %vm485, %v491, %v492
        %v494 = vrot.slane %v466, 1
        %v495 = vsel %vm485, %v492, %v494
        %v496 = vrot.slane %v467, 1
        %v497 = vrot.slane %v468, 1
        %v498 = vsel %vm485, %v496, %v497
        %v499 = vrot.slane %v469, 1
        %v500 = vsel %vm485, %v497, %v499
        %v501 = vrot.slane %v470, 1
        %v502 = vrot.slane %v471, 1
        %v503 = vsel %vm485, %v501, %v502
        %v504 = vrot.slane %v472, 1
        %v505 = vsel %vm485, %v502, %v504
        %v514 = vadd.f32 %v452, %v488
        %v515 = vadd.f32 %v453, %v490
        %v516 = vadd.f32 %v454, %v493
        %v517 = vadd.f32 %v455, %v495
        %v518 = vadd.f32 %v456, %v498
        %v519 = vadd.f32 %v457, %v500
        %v520 = vadd.f32 %v458, %v503
        %v521 = vadd.f32 %v459, %v505
        %v522 = vstv %s185
        %v523 = vmul.f32 %v522, %v341
        %v524 = vmul.f32 %v522, %v342
        %v525 = vmul.f32 %v522, %v343
        %v526 = vmul.f32 %v522, %v344
        %v527 = vmul.f32 %v522, %v345
        %v528 = vmul.f32 %v522, %v346
        %v529 = vmul.f32 %v522, %v347
        %v530 = vmul.f32 %v522, %v348
        %v531 = vmul.f32 %v522, %v349
        %v532 = vmul.f32 %v522, %v350
        %v533 = vmul.f32 %v522, %v351
        %v534 = vmul.f32 %v522, %v352
        %v547 = vrot.slane %v523, 1
        %v548 = vrot.slane %v524, 1
        %v549 = vsel %vm485, %v547, %v548
        %v550 = vrot.slane %v525, 1
        %v551 = vsel %vm485, %v548, %v550
        %v552 = vrot.slane %v526, 1
        %v553 = vrot.slane %v527, 1
        %v554 = vsel %vm485, %v552, %v553
        %v555 = vrot.slane %v528, 1
        %v556 = vsel %vm485, %v553, %v555
        %v557 = vrot.slane %v529, 1
        %v558 = vrot.slane %v530, 1
        %v559 = vsel %vm485, %v557, %v558
        %v560 = vrot.slane %v531, 1
        %v561 = vsel %vm485, %v558, %v560
        %v562 = vrot.slane %v532, 1
        %v563 = vrot.slane %v533, 1
        %v564 = vsel %vm485, %v562, %v563
        %v565 = vrot.slane %v534, 1
        %v566 = vsel %vm485, %v563, %v565
        %567 = vrot.lane.b32.xlu0 %v549, 127
        %v568 = vpop.permute.xlu0 %567
        %569 = vrot.lane.b32.xlu0 %v551, 127
        %v570 = vpop.permute.xlu0 %569
        %571 = vrot.lane.b32.xlu0 %v554, 127
        %v572 = vpop.permute.xlu0 %571
        %573 = vrot.lane.b32.xlu0 %v556, 127
        %v574 = vpop.permute.xlu0 %573
        %575 = vrot.lane.b32.xlu0 %v559, 127
        %v576 = vpop.permute.xlu0 %575
        %577 = vrot.lane.b32.xlu0 %v561, 127
        %v578 = vpop.permute.xlu0 %577
        %579 = vrot.lane.b32.xlu0 %v564, 127
        %v580 = vpop.permute.xlu0 %579
        %581 = vrot.lane.b32.xlu0 %v566, 127
        %v582 = vpop.permute.xlu0 %581
        %v591 = vadd.f32 %v514, %v568
        %v592 = vadd.f32 %v515, %v570
        %v593 = vadd.f32 %v516, %v572
        %v594 = vadd.f32 %v517, %v574
        %v595 = vadd.f32 %v518, %v576
        %v596 = vadd.f32 %v519, %v578
        %v597 = vadd.f32 %v520, %v580
        %v598 = vadd.f32 %v521, %v582
        %v599 = vstv %s186
        %v600 = vmul.f32 %v599, %v341
        %v601 = vmul.f32 %v599, %v342
        %v602 = vmul.f32 %v599, %v343
        %v603 = vmul.f32 %v599, %v344
        %v604 = vmul.f32 %v599, %v345
        %v605 = vmul.f32 %v599, %v346
        %v606 = vmul.f32 %v599, %v347
        %v607 = vmul.f32 %v599, %v348
        %v608 = vmul.f32 %v599, %v349
        %v609 = vmul.f32 %v599, %v350
        %v610 = vmul.f32 %v599, %v351
        %v611 = vmul.f32 %v599, %v352
        %v624 = vrot.slane %v600, 1
        %v625 = vrot.slane %v601, 1
        %v626 = vsel %vm485, %v624, %v625
        %v627 = vrot.slane %v602, 1
        %v628 = vsel %vm485, %v625, %v627
        %v629 = vrot.slane %v603, 1
        %v630 = vrot.slane %v604, 1
        %v631 = vsel %vm485, %v629, %v630
        %v632 = vrot.slane %v605, 1
        %v633 = vsel %vm485, %v630, %v632
        %v634 = vrot.slane %v606, 1
        %v635 = vrot.slane %v607, 1
        %v636 = vsel %vm485, %v634, %v635
        %v637 = vrot.slane %v608, 1
        %v638 = vsel %vm485, %v635, %v637
        %v639 = vrot.slane %v609, 1
        %v640 = vrot.slane %v610, 1
        %v641 = vsel %vm485, %v639, %v640
        %v642 = vrot.slane %v611, 1
        %v643 = vsel %vm485, %v640, %v642
        %644 = vrot.lane.b32.xlu0 %v626, 126
        %v645 = vpop.permute.xlu0 %644
        %646 = vrot.lane.b32.xlu0 %v628, 126
        %v647 = vpop.permute.xlu0 %646
        %648 = vrot.lane.b32.xlu0 %v631, 126
        %v649 = vpop.permute.xlu0 %648
        %650 = vrot.lane.b32.xlu0 %v633, 126
        %v651 = vpop.permute.xlu0 %650
        %652 = vrot.lane.b32.xlu0 %v636, 126
        %v653 = vpop.permute.xlu0 %652
        %654 = vrot.lane.b32.xlu0 %v638, 126
        %v655 = vpop.permute.xlu0 %654
        %656 = vrot.lane.b32.xlu0 %v641, 126
        %v657 = vpop.permute.xlu0 %656
        %658 = vrot.lane.b32.xlu0 %v643, 126
        %v659 = vpop.permute.xlu0 %658
        %v668 = vadd.f32 %v591, %v645
        %v669 = vadd.f32 %v592, %v647
        %v670 = vadd.f32 %v593, %v649
        %v671 = vadd.f32 %v594, %v651
        %v672 = vadd.f32 %v595, %v653
        %v673 = vadd.f32 %v596, %v655
        %v674 = vadd.f32 %v597, %v657
        %v675 = vadd.f32 %v598, %v659
        %v676 = vstv %s187
        %v677 = vmul.f32 %v676, %v341
        %v678 = vmul.f32 %v676, %v342
        %v679 = vmul.f32 %v676, %v343
        %v680 = vmul.f32 %v676, %v344
        %v681 = vmul.f32 %v676, %v345
        %v682 = vmul.f32 %v676, %v346
        %v683 = vmul.f32 %v676, %v347
        %v684 = vmul.f32 %v676, %v348
        %v685 = vmul.f32 %v676, %v349
        %v686 = vmul.f32 %v676, %v350
        %v687 = vmul.f32 %v676, %v351
        %v688 = vmul.f32 %v676, %v352
        %vm701 = vcmask 1045504
        %v702 = vrot.slane %v677, 2
        %v703 = vrot.slane %v678, 2
        %v704 = vsel %vm701, %v702, %v703
        %v705 = vrot.slane %v679, 2
        %v706 = vsel %vm701, %v703, %v705
        %v707 = vrot.slane %v680, 2
        %v708 = vrot.slane %v681, 2
        %v709 = vsel %vm701, %v707, %v708
        %v710 = vrot.slane %v682, 2
        %v711 = vsel %vm701, %v708, %v710
        %v712 = vrot.slane %v683, 2
        %v713 = vrot.slane %v684, 2
        %v714 = vsel %vm701, %v712, %v713
        %v715 = vrot.slane %v685, 2
        %v716 = vsel %vm701, %v713, %v715
        %v717 = vrot.slane %v686, 2
        %v718 = vrot.slane %v687, 2
        %v719 = vsel %vm701, %v717, %v718
        %v720 = vrot.slane %v688, 2
        %v721 = vsel %vm701, %v718, %v720
        %v730 = vadd.f32 %v668, %v704
        %v731 = vadd.f32 %v669, %v706
        %v732 = vadd.f32 %v670, %v709
        %v733 = vadd.f32 %v671, %v711
        %v734 = vadd.f32 %v672, %v714
        %v735 = vadd.f32 %v673, %v716
        %v736 = vadd.f32 %v674, %v719
        %v737 = vadd.f32 %v675, %v721
        %v738 = vstv %s188
        %v739 = vmul.f32 %v738, %v341
        %v740 = vmul.f32 %v738, %v342
        %v741 = vmul.f32 %v738, %v343
        %v742 = vmul.f32 %v738, %v344
        %v743 = vmul.f32 %v738, %v345
        %v744 = vmul.f32 %v738, %v346
        %v745 = vmul.f32 %v738, %v347
        %v746 = vmul.f32 %v738, %v348
        %v747 = vmul.f32 %v738, %v349
        %v748 = vmul.f32 %v738, %v350
        %v749 = vmul.f32 %v738, %v351
        %v750 = vmul.f32 %v738, %v352
        %v763 = vrot.slane %v739, 2
        %v764 = vrot.slane %v740, 2
        %v765 = vsel %vm701, %v763, %v764
        %v766 = vrot.slane %v741, 2
        %v767 = vsel %vm701, %v764, %v766
        %v768 = vrot.slane %v742, 2
        %v769 = vrot.slane %v743, 2
        %v770 = vsel %vm701, %v768, %v769
        %v771 = vrot.slane %v744, 2
        %v772 = vsel %vm701, %v769, %v771
        %v773 = vrot.slane %v745, 2
        %v774 = vrot.slane %v746, 2
        %v775 = vsel %vm701, %v773, %v774
        %v776 = vrot.slane %v747, 2
        %v777 = vsel %vm701, %v774, %v776
        %v778 = vrot.slane %v748, 2
        %v779 = vrot.slane %v749, 2
        %v780 = vsel %vm701, %v778, %v779
        %v781 = vrot.slane %v750, 2
        %v782 = vsel %vm701, %v779, %v781
        %783 = vrot.lane.b32.xlu0 %v765, 127
        %v784 = vpop.permute.xlu0 %783
        %785 = vrot.lane.b32.xlu0 %v767, 127
        %v786 = vpop.permute.xlu0 %785
        %787 = vrot.lane.b32.xlu0 %v770, 127
        %v788 = vpop.permute.xlu0 %787
        %789 = vrot.lane.b32.xlu0 %v772, 127
        %v790 = vpop.permute.xlu0 %789
        %791 = vrot.lane.b32.xlu0 %v775, 127
        %v792 = vpop.permute.xlu0 %791
        %793 = vrot.lane.b32.xlu0 %v777, 127
        %v794 = vpop.permute.xlu0 %793
        %795 = vrot.lane.b32.xlu0 %v780, 127
        %v796 = vpop.permute.xlu0 %795
        %797 = vrot.lane.b32.xlu0 %v782, 127
        %v798 = vpop.permute.xlu0 %797
        %v807 = vadd.f32 %v730, %v784
        %v808 = vadd.f32 %v731, %v786
        %v809 = vadd.f32 %v732, %v788
        %v810 = vadd.f32 %v733, %v790
        %v811 = vadd.f32 %v734, %v792
        %v812 = vadd.f32 %v735, %v794
        %v813 = vadd.f32 %v736, %v796
        %v814 = vadd.f32 %v737, %v798
        %v815 = vstv %s189
        %v816 = vmul.f32 %v815, %v341
        %v817 = vmul.f32 %v815, %v342
        %v818 = vmul.f32 %v815, %v343
        %v819 = vmul.f32 %v815, %v344
        %v820 = vmul.f32 %v815, %v345
        %v821 = vmul.f32 %v815, %v346
        %v822 = vmul.f32 %v815, %v347
        %v823 = vmul.f32 %v815, %v348
        %v824 = vmul.f32 %v815, %v349
        %v825 = vmul.f32 %v815, %v350
        %v826 = vmul.f32 %v815, %v351
        %v827 = vmul.f32 %v815, %v352
        %v840 = vrot.slane %v816, 2
        %v841 = vrot.slane %v817, 2
        %v842 = vsel %vm701, %v840, %v841
        %v843 = vrot.slane %v818, 2
        %v844 = vsel %vm701, %v841, %v843
        %v845 = vrot.slane %v819, 2
        %v846 = vrot.slane %v820, 2
        %v847 = vsel %vm701, %v845, %v846
        %v848 = vrot.slane %v821, 2
        %v849 = vsel %vm701, %v846, %v848
        %v850 = vrot.slane %v822, 2
        %v851 = vrot.slane %v823, 2
        %v852 = vsel %vm701, %v850, %v851
        %v853 = vrot.slane %v824, 2
        %v854 = vsel %vm701, %v851, %v853
        %v855 = vrot.slane %v825, 2
        %v856 = vrot.slane %v826, 2
        %v857 = vsel %vm701, %v855, %v856
        %v858 = vrot.slane %v827, 2
        %v859 = vsel %vm701, %v856, %v858
        %860 = vrot.lane.b32.xlu0 %v842, 126
        %v861 = vpop.permute.xlu0 %860
        %862 = vrot.lane.b32.xlu0 %v844, 126
        %v863 = vpop.permute.xlu0 %862
        %864 = vrot.lane.b32.xlu0 %v847, 126
        %v865 = vpop.permute.xlu0 %864
        %866 = vrot.lane.b32.xlu0 %v849, 126
        %v867 = vpop.permute.xlu0 %866
        %868 = vrot.lane.b32.xlu0 %v852, 126
        %v869 = vpop.permute.xlu0 %868
        %870 = vrot.lane.b32.xlu0 %v854, 126
        %v871 = vpop.permute.xlu0 %870
        %872 = vrot.lane.b32.xlu0 %v857, 126
        %v873 = vpop.permute.xlu0 %872
        %874 = vrot.lane.b32.xlu0 %v859, 126
        %v875 = vpop.permute.xlu0 %874
        %v884 = vadd.f32 %v807, %v861
        %v885 = vadd.f32 %v808, %v863
        %v886 = vadd.f32 %v809, %v865
        %v887 = vadd.f32 %v810, %v867
        %v888 = vadd.f32 %v811, %v869
        %v889 = vadd.f32 %v812, %v871
        %v890 = vadd.f32 %v813, %v873
        %v891 = vadd.f32 %v814, %v875
        %vm892 = vcmask 130048
        %893 = vst.msk [vmem:[%s178] sm:$0xff] %vm892, %v884
        %894 = vst.msk [vmem:[%s178 + $0x8] sm:$0xff] %vm892, %v885
        %895 = vst.msk [vmem:[%s178 + $0x10] sm:$0xff] %vm892, %v886
        %896 = vst.msk [vmem:[%s178 + $0x18] sm:$0xff] %vm892, %v887
        %897 = vst.msk [vmem:[%s178 + $0x20] sm:$0xff] %vm892, %v888
        %898 = vst.msk [vmem:[%s178 + $0x28] sm:$0xff] %vm892, %v889
        %899 = vst.msk [vmem:[%s178 + $0x30] sm:$0xff] %vm892, %v890
        %900 = vst.msk [vmem:[%s178 + $0x38] sm:$0xff] %vm892, %v891
        %s901 = sand.u32 %s75, 1
        %s902 = scalar_lea.sflag [#allocation4], %s901
        %s903 = sand.u32 %s75, 1
        %s904 = smul.addr %s903, 64
        %s905 = scalar_lea.vmem [#allocation7], %s904
        // Predicated region
        $region37: #{tpu_custom_call.1} parent=27 // pred_check
          %p906 = pneg %p85
        $region38: #{tpu_custom_call.1} parent=27 // pred_check_branch
          %908 = sbr.rel (%p906) target = $region40
        $region39: #{tpu_custom_call.1} parent=27 // pred_region
          %s909 = smul.u32 4, %s20
          %911 = vsyncadd %s902, 0
          %s912 = smul.addr %s909, 2
          %s913 = smul.addr %s912, 8
          %s914 = scalar_lea.hbm %s2, %s913
          %s915 = sshll.u32 %s905, 4
          %s916 = int_to_ptr.vmem [resolvable:$true] %s915
          %s917 = sshll.u32 %s914, 4
          %s918 = int_to_ptr.hbm [resolvable:$true] %s917
          %923 = dma.vmem_to_hbm [thread:$0]  %s916, 1024, %s918, %s902, 128, 128, 8
        $region40: #{tpu_custom_call.1} parent=27 // pred_fallthru
          _
      $region28: #{tpu_custom_call.1} parent=5 // pred_fallthru
        _
      %p924 = scmp.le.s32.totalorder 2, %s15
      // Predicated region
      $region41: #{tpu_custom_call.1} parent=5 // pred_check
        %p925 = pneg %p924
      $region42: #{tpu_custom_call.1} parent=5 // pred_check_branch
        %927 = sbr.rel (%p925) target = $region44
      $region43: #{tpu_custom_call.1} parent=5 // pred_region
        %s928 = ssub.s32 %s15, 2
        // Predicated region
        $region45: #{tpu_custom_call.1} parent=43 // pred_check
          %p929 = pneg %p91
        $region46: #{tpu_custom_call.1} parent=43 // pred_check_branch
          %931 = sbr.rel (%p929) target = $region48
        $region47: #{tpu_custom_call.1} parent=43 // pred_region
          %s932 = sand.u32 %s76, 1
          %s933 = scalar_lea.sflag [#allocation4], %s932
          %s934 = sand.u32 %s76, 1
          %s935 = smul.addr %s934, 64
          %s936 = scalar_lea.vmem [#allocation7], %s935
          %938 = dma.done %s933, 1024
        $region48: #{tpu_custom_call.1} parent=43 // pred_fallthru
          _
      $region44: #{tpu_custom_call.1} parent=5 // pred_fallthru
        _
    $region6: #{tpu_custom_call.1} parent=1 // loop_footer
      %s19 = sadd.s32 1, %s15
    $region7: #{tpu_custom_call.1} parent=1 // loop_footer_branch
      %14 = sbr.rel target = $region3
    $region8: #{tpu_custom_call.1} parent=1 // loop_exit
      _
    %939 = vsyncpa [#allocation3], 1
    %s940 = scalar_lea.sflag [#allocation3], 1
    %941 = vsyncpa %s940, 1
    %942 = vsyncpa [#allocation4], 1
    %s943 = scalar_lea.sflag [#allocation4], 1
    %944 = vsyncpa %s943, 1
    %945 = vsyncpa [#allocation5], 1
    %s946 = scalar_lea.sflag [#allocation5], 1
    %947 = vsyncpa %s946, 1

</llo_original>
